<compile_context>
chip_gen: v7x
topology: tpu7x:2x2x1
jax: 0.10.0
libtpu: 0.0.40
codegen_flags: <defaults>
</compile_context>

<pallas_src>
import math

import jax
import jax.numpy as jnp
from jax import lax
from jax.experimental import pallas as pl
from jax.experimental.pallas import tpu as pltpu


# ----------------------------------------------------------------------------
# Fused MHA kernel (per-head grid step)
# ----------------------------------------------------------------------------
def _make_mha_kernel(self_attn, return_attn, compute_dtype):
    def kernel(*refs):
        if self_attn:
            x_ref, wqkv_ref, bqkv_ref, wrep_ref, brep_ref, o_ref = refs[:6]
            rest = refs[6:]
        else:
            (xq_ref, xk_ref, xv_ref, wqkv_ref, bqkv_ref, wrep_ref, brep_ref,
             o_ref) = refs[:8]
            rest = refs[8:]
        if return_attn:
            p_ref, acc_ref = rest
        else:
            (acc_ref,) = rest

        head = pl.program_id(1)

        @pl.when(head == 0)
        def _():
            acc_ref[...] = jnp.zeros_like(acc_ref)

        # Per-head QKV projection (bf16 MXU feed, f32 accumulate).
        # 1/sqrt(d_k) is already folded into wq/bq.
        if self_attn:
            xq = x_ref[0].astype(compute_dtype)           # (S, d_model)
            xk = xv = xq
        else:
            xq = xq_ref[0].astype(compute_dtype)
            xk = xk_ref[0].astype(compute_dtype)
            xv = xv_ref[0].astype(compute_dtype)
        q = jnp.dot(xq, wqkv_ref[0, 0], preferred_element_type=jnp.float32) + bqkv_ref[0, 0]
        k = jnp.dot(xk, wqkv_ref[1, 0], preferred_element_type=jnp.float32) + bqkv_ref[1, 0]
        v = jnp.dot(xv, wqkv_ref[2, 0], preferred_element_type=jnp.float32) + bqkv_ref[2, 0]

        # Scores: contract the d_k axes directly (no k.T / XLU transpose).
        s = lax.dot_general(q.astype(compute_dtype), k.astype(compute_dtype),
                            (((1,), (1,)), ((), ())),
                            preferred_element_type=jnp.float32)      # (S, S) f32

        # Exact softmax (f32).
        m = jnp.max(s, axis=-1, keepdims=True)
        e = jnp.exp(s - m)
        p = e / jnp.sum(e, axis=-1, keepdims=True)
        if return_attn:
            p_ref[0, 0] = p.astype(p_ref.dtype)                       # lane-dense (S,S)

        # Per-head context (stays in registers/VMEM; never hits HBM).
        ctx = jnp.dot(p.astype(compute_dtype), v.astype(compute_dtype),
                      preferred_element_type=jnp.float32)             # (S, d_k)

        # rep Linear accumulated over heads: out = sum_h ctx_h @ w_rep[h].
        acc_ref[...] += jnp.dot(ctx.astype(compute_dtype), wrep_ref[0],
                                preferred_element_type=jnp.float32)

        @pl.when(head == pl.num_programs(1) - 1)
        def _():
            # rep = weight_norm(Linear)+ReLU; g/v already folded into w_rep.
            o_ref[0] = jnp.maximum(acc_ref[...] + brep_ref[...], 0.0).astype(o_ref.dtype)

    return kernel


def _fused_mha(xs, w_qkv_heads, b_qkv_heads, w_rep_heads, b_rep_row, *,
               num_heads, return_attn, compute_dtype=jnp.bfloat16,
               vmem_limit_bytes=None):
    """xs: (x,) for self-attention or (q_in, k_in, v_in).  Returns (out, p_attn|None)."""
    B, S, d_model = xs[0].shape
    d_k = d_model // num_heads
    self_attn = len(xs) == 1
    kernel = _make_mha_kernel(self_attn, return_attn, compute_dtype)

    x_spec = pl.BlockSpec((1, S, d_model), lambda b, h: (b, 0, 0))
    in_specs = [x_spec] * len(xs) + [
        pl.BlockSpec((3, 1, d_model, d_k), lambda b, h: (0, h, 0, 0)),   # W_qkv per head
        pl.BlockSpec((3, 1, 1, d_k), lambda b, h: (0, h, 0, 0)),         # b_qkv per head
        pl.BlockSpec((1, d_k, d_model), lambda b, h: (h, 0, 0)),         # W_rep per head
        pl.BlockSpec((1, d_model), lambda b, h: (0, 0)),                 # b_rep
    ]
    out_shape = [jax.ShapeDtypeStruct((B, S, d_model), xs[0].dtype)]
    out_specs = [pl.BlockSpec((1, S, d_model), lambda b, h: (b, 0, 0))]
    if return_attn:
        out_shape.append(jax.ShapeDtypeStruct((B, num_heads, S, S), xs[0].dtype))
        out_specs.append(pl.BlockSpec((1, 1, S, S), lambda b, h: (b, h, 0, 0)))

    outs = pl.pallas_call(
        kernel,
        out_shape=tuple(out_shape),
        grid_spec=pltpu.PrefetchScalarGridSpec(
            num_scalar_prefetch=0,
            grid=(B, num_heads),
            in_specs=in_specs,
            out_specs=out_specs,
            scratch_shapes=[pltpu.VMEM((S, d_model), jnp.float32)],
        ),
        compiler_params=pltpu.CompilerParams(
            dimension_semantics=("parallel", "arbitrary"),
            vmem_limit_bytes=vmem_limit_bytes),
    )(*xs, w_qkv_heads, b_qkv_heads, w_rep_heads, b_rep_row)

    if return_attn:
        return outs[0], outs[1]
    return outs[0], None


# ----------------------------------------------------------------------------
# Module: parameters + forward
# ----------------------------------------------------------------------------
def init_params(key, h, d_model, dtype=jnp.float32, compute_dtype=jnp.bfloat16):
    """Deterministic synthetic parameters (shapes match the PyTorch module)."""
    d_k = d_model // h
    keys = jax.random.split(key, 9)
    scale = 1.0 / math.sqrt(d_model)
    p = {}
    # self.linears = clones(nn.Linear(d_model, d_model), 3) -> q, k, v projections.
    for i, name in enumerate(("q", "k", "v")):
        p[f"w_{name}"] = jax.random.uniform(keys[2 * i], (d_model, d_model),
                                            dtype, -scale, scale)       # (in, out)
        p[f"b_{name}"] = jax.random.uniform(keys[2 * i + 1], (d_model,),
                                            dtype, -scale, scale)
    # self.rep = FCNet([d_model, d_model]) -> weight_norm(Linear) + ReLU.
    # weight_norm is pre-folded g*v/||v|| (per output column) -> plain Linear at eval.
    v_rep = jax.random.uniform(keys[6], (d_model, d_model), dtype, -scale, scale)
    g_rep = jax.random.uniform(keys[7], (d_model,), dtype, 0.5, 1.5)
    p["b_rep"] = jax.random.uniform(keys[8], (d_model,), dtype, -scale, scale)
    p["w_rep"] = v_rep * (g_rep / jnp.linalg.norm(v_rep, axis=0, keepdims=True))

    # ---- kernel-ready, head-major, MXU-dtype parameters ---------------------
    inv_sqrt_dk = 1.0 / math.sqrt(d_k)
    w_q_s = p["w_q"] * inv_sqrt_dk          # fold 1/sqrt(d_k) into the q projection
    b_q_s = p["b_q"] * inv_sqrt_dk

    def heads_w(w):                          # (D, D) -> (H, D, d_k)
        return w.reshape(d_model, h, d_k).transpose(1, 0, 2)

    def heads_b(b):                          # (D,) -> (H, 1, d_k)
        return b.reshape(h, 1, d_k)

    p["w_qkv_heads"] = jnp.stack(
        [heads_w(w_q_s), heads_w(p["w_k"]), heads_w(p["w_v"])], axis=0
    ).astype(compute_dtype)                                       # (3, H, D, d_k)
    p["b_qkv_heads"] = jnp.stack(
        [heads_b(b_q_s), heads_b(p["b_k"]), heads_b(p["b_v"])], axis=0
    ).astype(jnp.float32)                                         # (3, H, 1, d_k)
    p["w_rep_heads"] = p["w_rep"].reshape(h, d_k, d_model).astype(compute_dtype)
    p["b_rep_row"] = p["b_rep"].reshape(1, d_model).astype(jnp.float32)
    return p


def multi_headed_attention(params, query, key, value, h, mask=None,
                           return_attn=True, compute_dtype=jnp.bfloat16,
                           vmem_limit_bytes=None):
    """Forward pass of MultiHeadedAttention (eval mode, mask=None path)."""
    # TODO(synk): optional `mask` (masked_fill with -1e9) is not implemented.
    # TODO(synk): training-mode dropout (p=0.1) on p_attn is the eval-mode identity here.
    assert mask is None
    self_attn = (query is key) and (key is value)
    xs = (query,) if self_attn else (query, key, value)
    return _fused_mha(xs, params["w_qkv_heads"], params["b_qkv_heads"],
                      params["w_rep_heads"], params["b_rep_row"],
                      num_heads=h, return_attn=return_attn,
                      compute_dtype=compute_dtype,
                      vmem_limit_bytes=vmem_limit_bytes)


# ----------------------------------------------------------------------------
# Pure-JAX (f32) reference for a sanity check
# ----------------------------------------------------------------------------
def reference(params, query, key, value, h):
    B, S, d_model = query.shape
    d_k = d_model // h

    def project(x, w, b):
        y = x.reshape(B * S, d_model) @ w + b
        return y.reshape(B, S, h, d_k).transpose(0, 2, 1, 3)

    q = project(query, params["w_q"], params["b_q"])
    k = project(key, params["w_k"], params["b_k"])
    v = project(value, params["w_v"], params["b_v"])
    scores = jnp.einsum("bhqd,bhkd->bhqk", q, k) / math.sqrt(d_k)
    p = jax.nn.softmax(scores, axis=-1)
    x = jnp.einsum("bhqk,bhkd->bhqd", p, v)
    x = x.transpose(0, 2, 1, 3).reshape(B * S, d_model)
    out = jnp.maximum(x @ params["w_rep"] + params["b_rep"], 0.0)
    return out.reshape(B, S, d_model), p


if __name__ == "__main__":
    B, S, H, D_MODEL = 2, 8, 4, 32   # d_k = 8

    key0 = jax.random.PRNGKey(0)
    k_param, k_x, k_y, k_z = jax.random.split(key0, 4)
    params = init_params(k_param, H, D_MODEL)

    x = jax.random.normal(k_x, (B, S, D_MODEL), jnp.float32)

    # Self-attention, full path (also emits p_attn like the module's self.attn).
    out, attn = multi_headed_attention(params, x, x, x, H, return_attn=True)
    out = jax.block_until_ready(out)
    attn = jax.block_until_ready(attn)

    # Perf path: skip the O(S^2) p_attn HBM write entirely.
    out_fast, _ = multi_headed_attention(params, x, x, x, H, return_attn=False)
    out_fast = jax.block_until_ready(out_fast)

    ref_out, ref_attn = reference(params, x, x, x, H)
    assert out.shape == (B, S, D_MODEL) and attn.shape == (B, H, S, S)
    # Tolerances accommodate the bf16 MXU feeds (accumulation / softmax stay f32).
    assert jnp.allclose(out, ref_out, atol=3e-2, rtol=3e-2)
    assert jnp.allclose(attn, ref_attn, atol=1e-2, rtol=1e-2)
    assert jnp.allclose(out_fast, out, atol=1e-6, rtol=1e-6)

    # Cross-attention path (distinct q / k / v inputs).
    y = jax.random.normal(k_y, (B, S, D_MODEL), jnp.float32)
    z = jax.random.normal(k_z, (B, S, D_MODEL), jnp.float32)
    out_x, attn_x = multi_headed_attention(params, x, y, z, H, return_attn=True)
    out_x = jax.block_until_ready(out_x)
    ref_out_x, ref_attn_x = reference(params, x, y, z, H)
    assert jnp.allclose(out_x, ref_out_x, atol=3e-2, rtol=3e-2)
    assert jnp.allclose(attn_x, ref_attn_x, atol=1e-2, rtol=1e-2)

    print("KERNEL_OK")
</pallas_src>

<mosaic_0001>
module attributes {stable_mosaic.version = 11 : i64} {
  func.func @kernel(%arg0: i32, %arg1: i32, %arg2: memref<1x8x32xf32, #tpu.memory_space<vmem>>, %arg3: memref<3x1x32x8xbf16, #tpu.memory_space<vmem>>, %arg4: memref<3x1x1x8xf32, #tpu.memory_space<vmem>>, %arg5: memref<1x8x32xbf16, #tpu.memory_space<vmem>>, %arg6: memref<1x32xf32, #tpu.memory_space<vmem>>, %arg7: memref<1x8x32xf32, #tpu.memory_space<vmem>>, %arg8: memref<1x1x8x8xf32, #tpu.memory_space<vmem>>, %arg9: memref<8x32xf32, #tpu.memory_space<vmem>>) attributes {dimension_semantics = [#tpu.dimension_semantics<parallel>, #tpu.dimension_semantics<arbitrary>], iteration_bounds = array<i64: 2, 4>, scalar_prefetch = 0 : i64, scratch_operands = 1 : i64, tpu.core_type = #tpu.core_type<tc>, window_params = [{transform_indices = @transform_0, window_bounds = array<i64: 1, 8, 32>}, {transform_indices = @transform_1, window_bounds = array<i64: 3, 1, 32, 8>}, {transform_indices = @transform_2, window_bounds = array<i64: 3, 1, 1, 8>}, {transform_indices = @transform_3, window_bounds = array<i64: 1, 8, 32>}, {pipeline_mode = #tpu.pipeline_mode<synchronous>, transform_indices = @transform_4, window_bounds = array<i64: 1, 32>}, {transform_indices = @transform_5, window_bounds = array<i64: 1, 8, 32>}, {transform_indices = @transform_6, window_bounds = array<i64: 1, 1, 8, 8>}]} {
    %c0_i32 = arith.constant 0 : i32
    %0 = arith.cmpi eq, %arg1, %c0_i32 : i32
    %1 = arith.extui %0 : i1 to i32
    %c0_i32_0 = arith.constant 0 : i32
    %2 = arith.cmpi ne, %1, %c0_i32_0 : i32
    scf.if %2 {
      %cst_44 = arith.constant 0.000000e+00 : f32
      %55 = vector.broadcast %cst_44 : f32 to vector<8x32xf32>
      %c0_45 = arith.constant 0 : index
      %c0_46 = arith.constant 0 : index
      %56 = vector.load %arg9[%c0_45, %c0_46] : memref<8x32xf32, #tpu.memory_space<vmem>>, vector<8x32xf32>
      tpu.vector_store %arg9[%c0_45, %c0_46], %55 {strides = array<i32>} : memref<8x32xf32, #tpu.memory_space<vmem>>, vector<8x32xf32>,
    } else {
    }
    %c0 = arith.constant 0 : index
    %c0_1 = arith.constant 0 : index
    %c0_2 = arith.constant 0 : index
    %3 = vector.load %arg2[%c0, %c0_1, %c0_2] : memref<1x8x32xf32, #tpu.memory_space<vmem>>, vector<1x8x32xf32>
    %4 = vector.shape_cast %3 : vector<1x8x32xf32> to vector<8x32xf32>
    %5 = arith.truncf %4 : vector<8x32xf32> to vector<8x32xbf16>
    %c0_3 = arith.constant 0 : index
    %c0_4 = arith.constant 0 : index
    %c0_5 = arith.constant 0 : index
    %c0_6 = arith.constant 0 : index
    %6 = vector.load %arg3[%c0_3, %c0_4, %c0_5, %c0_6] : memref<3x1x32x8xbf16, #tpu.memory_space<vmem>>, vector<1x1x32x8xbf16>
    %7 = vector.shape_cast %6 : vector<1x1x32x8xbf16> to vector<32x8xbf16>
    %cst = arith.constant dense<0.000000e+00> : vector<8x8xf32>
    %8 = tpu.matmul %5, %7, %cst {dimension_numbers = #tpu.dot_dimension_numbers<[1], [0], [0], [1], [0, 0, 1, 1], [], []>} : vector<8x32xbf16>, vector<32x8xbf16>, vector<8x8xf32> -> vector<8x8xf32>
    %c0_7 = arith.constant 0 : index
    %c0_8 = arith.constant 0 : index
    %c0_9 = arith.constant 0 : index
    %c0_10 = arith.constant 0 : index
    %9 = vector.load %arg4[%c0_7, %c0_8, %c0_9, %c0_10] : memref<3x1x1x8xf32, #tpu.memory_space<vmem>>, vector<1x1x1x8xf32>
    %10 = vector.shape_cast %9 : vector<1x1x1x8xf32> to vector<1x8xf32>
    %11 = vector.broadcast %10 : vector<1x8xf32> to vector<8x8xf32>
    %12 = arith.addf %8, %11 : vector<8x8xf32>
    %c1 = arith.constant 1 : index
    %c0_11 = arith.constant 0 : index
    %c0_12 = arith.constant 0 : index
    %c0_13 = arith.constant 0 : index
    %13 = vector.load %arg3[%c1, %c0_11, %c0_12, %c0_13] : memref<3x1x32x8xbf16, #tpu.memory_space<vmem>>, vector<1x1x32x8xbf16>
    %14 = vector.shape_cast %13 : vector<1x1x32x8xbf16> to vector<32x8xbf16>
    %cst_14 = arith.constant dense<0.000000e+00> : vector<8x8xf32>
    %15 = tpu.matmul %5, %14, %cst_14 {dimension_numbers = #tpu.dot_dimension_numbers<[1], [0], [0], [1], [0, 0, 1, 1], [], []>} : vector<8x32xbf16>, vector<32x8xbf16>, vector<8x8xf32> -> vector<8x8xf32>
    %c1_15 = arith.constant 1 : index
    %c0_16 = arith.constant 0 : index
    %c0_17 = arith.constant 0 : index
    %c0_18 = arith.constant 0 : index
    %16 = vector.load %arg4[%c1_15, %c0_16, %c0_17, %c0_18] : memref<3x1x1x8xf32, #tpu.memory_space<vmem>>, vector<1x1x1x8xf32>
    %17 = vector.shape_cast %16 : vector<1x1x1x8xf32> to vector<1x8xf32>
    %18 = vector.broadcast %17 : vector<1x8xf32> to vector<8x8xf32>
    %19 = arith.addf %15, %18 : vector<8x8xf32>
    %c2 = arith.constant 2 : index
    %c0_19 = arith.constant 0 : index
    %c0_20 = arith.constant 0 : index
    %c0_21 = arith.constant 0 : index
    %20 = vector.load %arg3[%c2, %c0_19, %c0_20, %c0_21] : memref<3x1x32x8xbf16, #tpu.memory_space<vmem>>, vector<1x1x32x8xbf16>
    %21 = vector.shape_cast %20 : vector<1x1x32x8xbf16> to vector<32x8xbf16>
    %cst_22 = arith.constant dense<0.000000e+00> : vector<8x8xf32>
    %22 = tpu.matmul %5, %21, %cst_22 {dimension_numbers = #tpu.dot_dimension_numbers<[1], [0], [0], [1], [0, 0, 1, 1], [], []>} : vector<8x32xbf16>, vector<32x8xbf16>, vector<8x8xf32> -> vector<8x8xf32>
    %c2_23 = arith.constant 2 : index
    %c0_24 = arith.constant 0 : index
    %c0_25 = arith.constant 0 : index
    %c0_26 = arith.constant 0 : index
    %23 = vector.load %arg4[%c2_23, %c0_24, %c0_25, %c0_26] : memref<3x1x1x8xf32, #tpu.memory_space<vmem>>, vector<1x1x1x8xf32>
    %24 = vector.shape_cast %23 : vector<1x1x1x8xf32> to vector<1x8xf32>
    %25 = vector.broadcast %24 : vector<1x8xf32> to vector<8x8xf32>
    %26 = arith.addf %22, %25 : vector<8x8xf32>
    %27 = arith.truncf %12 : vector<8x8xf32> to vector<8x8xbf16>
    %28 = arith.truncf %19 : vector<8x8xf32> to vector<8x8xbf16>
    %cst_27 = arith.constant dense<0.000000e+00> : vector<8x8xf32>
    %29 = tpu.matmul %27, %28, %cst_27 {dimension_numbers = #tpu.dot_dimension_numbers<[1], [1], [0], [0], [0, 0, 1, 0], [], []>} : vector<8x8xbf16>, vector<8x8xbf16>, vector<8x8xf32> -> vector<8x8xf32>
    %cst_28 = arith.constant dense<0xFF800000> : vector<8xf32>
    %30 = vector.multi_reduction <maximumf>, %29, %cst_28 [1] : vector<8x8xf32> to vector<8xf32>
    %31 = vector.shape_cast %30 : vector<8xf32> to vector<8x1xf32>
    %32 = vector.broadcast %31 : vector<8x1xf32> to vector<8x8xf32>
    %33 = arith.subf %29, %32 : vector<8x8xf32>
    %34 = math.exp %33 : vector<8x8xf32>
    %cst_29 = arith.constant dense<0.000000e+00> : vector<8xf32>
    %35 = vector.multi_reduction <add>, %34, %cst_29 [1] : vector<8x8xf32> to vector<8xf32>
    %36 = vector.shape_cast %35 : vector<8xf32> to vector<8x1xf32>
    %37 = vector.broadcast %36 : vector<8x1xf32> to vector<8x8xf32>
    %38 = arith.divf %34, %37 : vector<8x8xf32>
    %c0_30 = arith.constant 0 : index
    %c0_31 = arith.constant 0 : index
    %c0_32 = arith.constant 0 : index
    %c0_33 = arith.constant 0 : index
    %39 = vector.load %arg8[%c0_30, %c0_31, %c0_32, %c0_33] : memref<1x1x8x8xf32, #tpu.memory_space<vmem>>, vector<1x1x8x8xf32>
    %40 = vector.shape_cast %39 : vector<1x1x8x8xf32> to vector<8x8xf32>
    %41 = vector.shape_cast %38 : vector<8x8xf32> to vector<1x1x8x8xf32>
    tpu.vector_store %arg8[%c0_30, %c0_31, %c0_32, %c0_33], %41 {strides = array<i32>} : memref<1x1x8x8xf32, #tpu.memory_space<vmem>>, vector<1x1x8x8xf32>,
    %42 = arith.truncf %38 : vector<8x8xf32> to vector<8x8xbf16>
    %43 = arith.truncf %26 : vector<8x8xf32> to vector<8x8xbf16>
    %cst_34 = arith.constant dense<0.000000e+00> : vector<8x8xf32>
    %44 = tpu.matmul %42, %43, %cst_34 {dimension_numbers = #tpu.dot_dimension_numbers<[1], [0], [0], [1], [0, 0, 1, 1], [], []>} : vector<8x8xbf16>, vector<8x8xbf16>, vector<8x8xf32> -> vector<8x8xf32>
    %c0_35 = arith.constant 0 : index
    %c0_36 = arith.constant 0 : index
    %45 = vector.load %arg9[%c0_35, %c0_36] : memref<8x32xf32, #tpu.memory_space<vmem>>, vector<8x32xf32>
    %46 = arith.truncf %44 : vector<8x8xf32> to vector<8x8xbf16>
    %c0_37 = arith.constant 0 : index
    %c0_38 = arith.constant 0 : index
    %c0_39 = arith.constant 0 : index
    %47 = vector.load %arg5[%c0_37, %c0_38, %c0_39] : memref<1x8x32xbf16, #tpu.memory_space<vmem>>, vector<1x8x32xbf16>
    %48 = vector.shape_cast %47 : vector<1x8x32xbf16> to vector<8x32xbf16>
    %cst_40 = arith.constant dense<0.000000e+00> : vector<8x32xf32>
    %49 = tpu.matmul %46, %48, %cst_40 {dimension_numbers = #tpu.dot_dimension_numbers<[1], [0], [0], [1], [0, 0, 1, 1], [], []>} : vector<8x8xbf16>, vector<8x32xbf16>, vector<8x32xf32> -> vector<8x32xf32>
    %50 = arith.addf %45, %49 : vector<8x32xf32>
    %c0_41 = arith.constant 0 : index
    %c0_42 = arith.constant 0 : index
    %51 = vector.load %arg9[%c0_41, %c0_42] : memref<8x32xf32, #tpu.memory_space<vmem>>, vector<8x32xf32>
    tpu.vector_store %arg9[%c0_41, %c0_42], %50 {strides = array<i32>} : memref<8x32xf32, #tpu.memory_space<vmem>>, vector<8x32xf32>,
    %c3_i32 = arith.constant 3 : i32
    %52 = arith.cmpi eq, %arg1, %c3_i32 : i32
    %53 = arith.extui %52 : i1 to i32
    %c0_i32_43 = arith.constant 0 : i32
    %54 = arith.cmpi ne, %53, %c0_i32_43 : i32
    scf.if %54 {
      %c0_44 = arith.constant 0 : index
      %c0_45 = arith.constant 0 : index
      %55 = vector.load %arg9[%c0_44, %c0_45] : memref<8x32xf32, #tpu.memory_space<vmem>>, vector<8x32xf32>
      %c0_46 = arith.constant 0 : index
      %c0_47 = arith.constant 0 : index
      %56 = vector.load %arg6[%c0_46, %c0_47] : memref<1x32xf32, #tpu.memory_space<vmem>>, vector<1x32xf32>
      %57 = vector.broadcast %56 : vector<1x32xf32> to vector<8x32xf32>
      %58 = arith.addf %55, %57 : vector<8x32xf32>
      %cst_48 = arith.constant 0.000000e+00 : f32
      %59 = vector.broadcast %cst_48 : f32 to vector<8x32xf32>
      %60 = arith.maximumf %58, %59 : vector<8x32xf32>
      %c0_49 = arith.constant 0 : index
      %c0_50 = arith.constant 0 : index
      %c0_51 = arith.constant 0 : index
      %61 = vector.load %arg7[%c0_49, %c0_50, %c0_51] : memref<1x8x32xf32, #tpu.memory_space<vmem>>, vector<1x8x32xf32>
      %62 = vector.shape_cast %61 : vector<1x8x32xf32> to vector<8x32xf32>
      %63 = vector.shape_cast %60 : vector<8x32xf32> to vector<1x8x32xf32>
      tpu.vector_store %arg7[%c0_49, %c0_50, %c0_51], %63 {strides = array<i32>} : memref<1x8x32xf32, #tpu.memory_space<vmem>>, vector<1x8x32xf32>,
    } else {
    }
    return
  }
  func.func @transform_0(%arg0: i32, %arg1: i32) -> (i32, i32, i32) {
    %c0_i32 = arith.constant 0 : i32
    %c0_i32_0 = arith.constant 0 : i32
    %c0_i32_1 = arith.constant 0 : i32
    return %arg0, %c0_i32, %c0_i32_0 : i32, i32, i32
  }
  func.func @transform_1(%arg0: i32, %arg1: i32) -> (i32, i32, i32, i32) {
    %c0_i32 = arith.constant 0 : i32
    %c0_i32_0 = arith.constant 0 : i32
    %c0_i32_1 = arith.constant 0 : i32
    %c0_i32_2 = arith.constant 0 : i32
    return %c0_i32, %arg1, %c0_i32_0, %c0_i32_1 : i32, i32, i32, i32
  }
  func.func @transform_2(%arg0: i32, %arg1: i32) -> (i32, i32, i32, i32) {
    %c0_i32 = arith.constant 0 : i32
    %c0_i32_0 = arith.constant 0 : i32
    %c0_i32_1 = arith.constant 0 : i32
    %c0_i32_2 = arith.constant 0 : i32
    return %c0_i32, %arg1, %c0_i32_0, %c0_i32_1 : i32, i32, i32, i32
  }
  func.func @transform_3(%arg0: i32, %arg1: i32) -> (i32, i32, i32) {
    %c0_i32 = arith.constant 0 : i32
    %c0_i32_0 = arith.constant 0 : i32
    %c0_i32_1 = arith.constant 0 : i32
    return %arg1, %c0_i32, %c0_i32_0 : i32, i32, i32
  }
  func.func @transform_4(%arg0: i32, %arg1: i32) -> (i32, i32) {
    %c0_i32 = arith.constant 0 : i32
    %c0_i32_0 = arith.constant 0 : i32
    %c0_i32_1 = arith.constant 0 : i32
    return %c0_i32, %c0_i32_0 : i32, i32
  }
  func.func @transform_5(%arg0: i32, %arg1: i32) -> (i32, i32, i32) {
    %c0_i32 = arith.constant 0 : i32
    %c0_i32_0 = arith.constant 0 : i32
    %c0_i32_1 = arith.constant 0 : i32
    return %arg0, %c0_i32, %c0_i32_0 : i32, i32, i32
  }
  func.func @transform_6(%arg0: i32, %arg1: i32) -> (i32, i32, i32, i32) {
    %c0_i32 = arith.constant 0 : i32
    %c0_i32_0 = arith.constant 0 : i32
    %c0_i32_1 = arith.constant 0 : i32
    return %arg0, %arg1, %c0_i32, %c0_i32_0 : i32, i32, i32, i32
  }
}

</mosaic_0001>

<llo_original>
// kernel: tpu_custom_call.1
$region0: #{tpu_custom_call.1}
  #allocation0 [shape = 'u32[]', space=smem, size = 0x4, offset = 0x4, fixed_abs, tag = 'smem constant byte address 0x4 - core index']
  #allocation1 [shape = 'u32[144,128]{1,0:T(1,128)}', space=vmem, size = 0x12000, scoped, tag = 'internal scratch']
  #allocation2 [shape = 'f32[8,32]{1,0:T(8,128)}', space=vmem, size = 0x1000, scoped, tag = 'scratch operand']
  %s0 = inlined_call_operand.vmem [shape: f32[2,8,32], index: 0, kind: input, shape index: {}]
  %s1 = inlined_call_operand.vmem [shape: bf16[3,4,32,8], index: 1, kind: input, shape index: {}]
  %s2 = inlined_call_operand.vmem [shape: f32[3,4,1,8], index: 2, kind: input, shape index: {}]
  %s3 = inlined_call_operand.vmem [shape: bf16[4,8,32], index: 3, kind: input, shape index: {}]
  %s4 = inlined_call_operand.vmem [shape: f32[1,32], index: 4, kind: input, shape index: {}]
  %s5 = inlined_call_operand.hbm [shape: f32[2,8,32], index: 5, kind: output, shape index: {0}]
  %s6 = inlined_call_operand.hbm [shape: f32[2,4,8,8], index: 6, kind: output, shape index: {1}]
  %7 = xla_tuple %s5, %s6
  %s8 = sld [smem:[#allocation0]]
  $region144: #{tpu_custom_call.1} parent=0
    _
  %s10 = ssub.s32 1, %s8
  %s11 = scalar_select 0, %s10, %s8
  $region1: #{tpu_custom_call.1} parent=0
    #allocation3 [shape = 'u8[49152]{0}', space=vmem, size = 0xc000, scoped, tag = 'input window, operand 1']
    #allocation4 [shape = 'u8[3072]{0}', space=vmem, size = 0xc00, scoped, tag = 'input window, operand 2']
    #allocation5 [shape = 'u8[8192]{0}', space=vmem, size = 0x2000, scoped, tag = 'output window, operand 0']
    #allocation6 [shape = 's32[2]{0}', space=sflag, size = 0x8, scoped, tag = 'scoped memory for tpu_custom_call.1']
    #allocation7 [shape = 'u8[8192]{0}', space=vmem, size = 0x2000, scoped, tag = 'output window, operand 1']
    #allocation8 [shape = 's32[2]{0}', space=sflag, size = 0x8, scoped, tag = 'scoped memory for tpu_custom_call.1']
    %12 = vsyncpa [#allocation6], 0
    %s13 = scalar_lea.sflag [#allocation6], 1
    %14 = vsyncpa %s13, 0
    %15 = vsyncpa [#allocation8], 0
    %s16 = scalar_lea.sflag [#allocation8], 1
    %17 = vsyncpa %s16, 0
    loop: start=0, step=1, limit=10
    $region2: #{tpu_custom_call.1} parent=1 // loop_pre_header
      _
    $region3: #{tpu_custom_call.1} parent=1 // loop_header
      %s19 = sphi 0, %s23
      %p20 = scmp.ge.s32.totalorder %s19, 10
      %s26 = sphi 0, %s38
      %s27 = sphi 0, %s34
      %s28 = sphi 0, %s26
      %s29 = sphi 0, %s27
      %s30 = sphi 0, %s28
      %s31 = sphi 0, %s29
      %s41 = sphi 0, %s43
      %s44 = sphi 0, %s41
      %s45 = sphi 0, %s44
      %s61 = sphi 0, %s45
      %s67 = sphi 0, %s69
      %s70 = sphi 0, %s67
      %s71 = sphi 0, %s70
      %s87 = sphi 0, %s71
      %s93 = sphi 0, %s95
      %s96 = sphi 0, %s93
      %s97 = sphi 0, %s96
      %s113 = sphi 0, %s97
      %s119 = sphi 0, %s121
      %s122 = sphi 0, %s119
      %s123 = sphi 0, %s122
      %s139 = sphi 0, %s123
      %s143 = sphi 0, %s143
      %s145 = sphi 0, %s143
      %s146 = sphi 0, %s145
      %s160 = sphi 0, %s146
      %s166 = sphi 0, %s168
      %s169 = sphi 0, %s166
      %s170 = sphi 0, %s169
      %s186 = sphi 0, %s170
      %s194 = sphi 0, %s196
      %s197 = sphi 0, %s194
      %s198 = sphi 0, %s197
      %s214 = sphi 0, %s198
    $region4: #{tpu_custom_call.1} parent=1 // loop_header_branch
      %22 = sbr.rel (%p20) target = $region8
    $region5: #{tpu_custom_call.1} parent=1 // loop_body
      %s24 = ssub.s32 %s19, 1
      %s25 = ssub.s32 %s19, 2
      %s32 = sadd.s32 1, %s27
      %p33 = scmp.ge.s32.totalorder %s32, 4
      %s34 = scalar_select %p33, 0, %s32
      %s35 = sadd.s32 1, %s26
      %s36 = scalar_select %p33, %s35, %s26
      %p37 = scmp.ge.s32.totalorder %s36, 2
      %s38 = scalar_select %p37, 0, %s36
      %s39 = ssub.s32 %s26, %s38
      %p40 = scmp.eq.s32.totalorder %s39, 0
      %s42 = sadd.s32 %s41, 1
      %s43 = scalar_select %p40, %s41, %s42
      %p46 = pneg %p40
      %p47 = scmp.eq.s32.totalorder %s19, 7
      %p48 = por %p46, %p47
      %p49 = scmp.ne.s32.totalorder %s41, %s44
      %p50 = scmp.eq.s32.totalorder %s19, 0
      %p51 = por %p49, %p50
      %p52 = scmp.ne.s32.totalorder %s41, %s44
      %p53 = scmp.eq.s32.totalorder %s24, 7
      %p54 = por %p52, %p53
      %p55 = scmp.ne.s32.totalorder %s44, %s45
      %p56 = scmp.eq.s32.totalorder %s24, 0
      %p57 = por %p55, %p56
      %p58 = scmp.ne.s32.totalorder %s44, %s45
      %p59 = scmp.eq.s32.totalorder %s25, 7
      %p60 = por %p58, %p59
      %p62 = scmp.ne.s32.totalorder %s45, %s61
      %p63 = scmp.eq.s32.totalorder %s25, 0
      %p64 = por %p62, %p63
      %s65 = ssub.s32 %s27, %s34
      %p66 = scmp.eq.s32.totalorder %s65, 0
      %s68 = sadd.s32 %s67, 1
      %s69 = scalar_select %p66, %s67, %s68
      %p72 = pneg %p66
      %p73 = scmp.eq.s32.totalorder %s19, 7
      %p74 = por %p72, %p73
      %p75 = scmp.ne.s32.totalorder %s67, %s70
      %p76 = scmp.eq.s32.totalorder %s19, 0
      %p77 = por %p75, %p76
      %p78 = scmp.ne.s32.totalorder %s67, %s70
      %p79 = scmp.eq.s32.totalorder %s24, 7
      %p80 = por %p78, %p79
      %p81 = scmp.ne.s32.totalorder %s70, %s71
      %p82 = scmp.eq.s32.totalorder %s24, 0
      %p83 = por %p81, %p82
      %p84 = scmp.ne.s32.totalorder %s70, %s71
      %p85 = scmp.eq.s32.totalorder %s25, 7
      %p86 = por %p84, %p85
      %p88 = scmp.ne.s32.totalorder %s71, %s87
      %p89 = scmp.eq.s32.totalorder %s25, 0
      %p90 = por %p88, %p89
      %s91 = ssub.s32 %s27, %s34
      %p92 = scmp.eq.s32.totalorder %s91, 0
      %s94 = sadd.s32 %s93, 1
      %s95 = scalar_select %p92, %s93, %s94
      %p98 = pneg %p92
      %p99 = scmp.eq.s32.totalorder %s19, 7
      %p100 = por %p98, %p99
      %p101 = scmp.ne.s32.totalorder %s93, %s96
      %p102 = scmp.eq.s32.totalorder %s19, 0
      %p103 = por %p101, %p102
      %p104 = scmp.ne.s32.totalorder %s93, %s96
      %p105 = scmp.eq.s32.totalorder %s24, 7
      %p106 = por %p104, %p105
      %p107 = scmp.ne.s32.totalorder %s96, %s97
      %p108 = scmp.eq.s32.totalorder %s24, 0
      %p109 = por %p107, %p108
      %p110 = scmp.ne.s32.totalorder %s96, %s97
      %p111 = scmp.eq.s32.totalorder %s25, 7
      %p112 = por %p110, %p111
      %p114 = scmp.ne.s32.totalorder %s97, %s113
      %p115 = scmp.eq.s32.totalorder %s25, 0
      %p116 = por %p114, %p115
      %s117 = ssub.s32 %s27, %s34
      %p118 = scmp.eq.s32.totalorder %s117, 0
      %s120 = sadd.s32 %s119, 1
      %s121 = scalar_select %p118, %s119, %s120
      %p124 = pneg %p118
      %p125 = scmp.eq.s32.totalorder %s19, 7
      %p126 = por %p124, %p125
      %p127 = scmp.ne.s32.totalorder %s119, %s122
      %p128 = scmp.eq.s32.totalorder %s19, 0
      %p129 = por %p127, %p128
      %p130 = scmp.ne.s32.totalorder %s119, %s122
      %p131 = scmp.eq.s32.totalorder %s24, 7
      %p132 = por %p130, %p131
      %p133 = scmp.ne.s32.totalorder %s122, %s123
      %p134 = scmp.eq.s32.totalorder %s24, 0
      %p135 = por %p133, %p134
      %p136 = scmp.ne.s32.totalorder %s122, %s123
      %p137 = scmp.eq.s32.totalorder %s25, 7
      %p138 = por %p136, %p137
      %p140 = scmp.ne.s32.totalorder %s123, %s139
      %p141 = scmp.eq.s32.totalorder %s25, 0
      %p142 = por %p140, %p141
      %s144 = sadd.s32 %s143, 1
      %p147 = scmp.eq.s32.totalorder %s19, 7
      %p148 = scmp.ne.s32.totalorder %s143, %s145
      %p149 = scmp.eq.s32.totalorder %s19, 0
      %p150 = por %p148, %p149
      %p151 = scmp.ne.s32.totalorder %s143, %s145
      %p152 = scmp.eq.s32.totalorder %s24, 7
      %p153 = por %p151, %p152
      %p154 = scmp.ne.s32.totalorder %s145, %s146
      %p155 = scmp.eq.s32.totalorder %s24, 0
      %p156 = por %p154, %p155
      %p157 = scmp.ne.s32.totalorder %s145, %s146
      %p158 = scmp.eq.s32.totalorder %s25, 7
      %p159 = por %p157, %p158
      %p161 = scmp.ne.s32.totalorder %s146, %s160
      %p162 = scmp.eq.s32.totalorder %s25, 0
      %p163 = por %p161, %p162
      %s164 = ssub.s32 %s26, %s38
      %p165 = scmp.eq.s32.totalorder %s164, 0
      %s167 = sadd.s32 %s166, 1
      %s168 = scalar_select %p165, %s166, %s167
      %p171 = pneg %p165
      %p172 = scmp.eq.s32.totalorder %s19, 7
      %p173 = por %p171, %p172
      %p174 = scmp.ne.s32.totalorder %s166, %s169
      %p175 = scmp.eq.s32.totalorder %s19, 0
      %p176 = por %p174, %p175
      %p177 = scmp.ne.s32.totalorder %s166, %s169
      %p178 = scmp.eq.s32.totalorder %s24, 7
      %p179 = por %p177, %p178
      %p180 = scmp.ne.s32.totalorder %s169, %s170
      %p181 = scmp.eq.s32.totalorder %s24, 0
      %p182 = por %p180, %p181
      %p183 = scmp.ne.s32.totalorder %s169, %s170
      %p184 = scmp.eq.s32.totalorder %s25, 7
      %p185 = por %p183, %p184
      %p187 = scmp.ne.s32.totalorder %s170, %s186
      %p188 = scmp.eq.s32.totalorder %s25, 0
      %p189 = por %p187, %p188
      %s190 = ssub.s32 %s26, %s38
      %s191 = ssub.s32 %s27, %s34
      %s192 = sor.u32 %s190, %s191
      %p193 = scmp.eq.s32.totalorder %s192, 0
      %s195 = sadd.s32 %s194, 1
      %s196 = scalar_select %p193, %s194, %s195
      %p199 = pneg %p193
      %p200 = scmp.eq.s32.totalorder %s19, 7
      %p201 = por %p199, %p200
      %p202 = scmp.ne.s32.totalorder %s194, %s197
      %p203 = scmp.eq.s32.totalorder %s19, 0
      %p204 = por %p202, %p203
      %p205 = scmp.ne.s32.totalorder %s194, %s197
      %p206 = scmp.eq.s32.totalorder %s24, 7
      %p207 = por %p205, %p206
      %p208 = scmp.ne.s32.totalorder %s197, %s198
      %p209 = scmp.eq.s32.totalorder %s24, 0
      %p210 = por %p208, %p209
      %p211 = scmp.ne.s32.totalorder %s197, %s198
      %p212 = scmp.eq.s32.totalorder %s25, 7
      %p213 = por %p211, %p212
      %p215 = scmp.ne.s32.totalorder %s198, %s214
      %p216 = scmp.eq.s32.totalorder %s25, 0
      %p217 = por %p215, %p216
      %p218 = scmp.le.s32.totalorder 1, %s19
      %p219 = scmp.lt.s32.totalorder %s19, 9
      %p220 = pnand %p218, %p219
      %p221 = pneg %p220
      // Predicated region
      $region9: #{tpu_custom_call.1} parent=5 // pred_check
        _
      $region10: #{tpu_custom_call.1} parent=5 // pred_check_branch
        %223 = sbr.rel (%p220) target = $region12
      $region11: #{tpu_custom_call.1} parent=5 // pred_region
        %s224 = ssub.s32 %s19, 1
        // Predicated region
        $region13: #{tpu_custom_call.1} parent=11 // pred_check
          %p225 = pneg %p156
        $region14: #{tpu_custom_call.1} parent=11 // pred_check_branch
          %227 = sbr.rel (%p225) target = $region16
        $region15: #{tpu_custom_call.1} parent=11 // pred_region
          _
        $region16: #{tpu_custom_call.1} parent=11 // pred_fallthru
          _
      $region12: #{tpu_custom_call.1} parent=5 // pred_fallthru
        _
      %p228 = scmp.lt.s32.totalorder %s19, 8
      // Predicated region
      $region17: #{tpu_custom_call.1} parent=5 // pred_check
        %p229 = pneg %p228
      $region18: #{tpu_custom_call.1} parent=5 // pred_check_branch
        %231 = sbr.rel (%p229) target = $region20
      $region19: #{tpu_custom_call.1} parent=5 // pred_region
        // Predicated region
        $region21: #{tpu_custom_call.1} parent=19 // pred_check
          %p232 = pneg %p51
        $region22: #{tpu_custom_call.1} parent=19 // pred_check_branch
          %234 = sbr.rel (%p232) target = $region24
        $region23: #{tpu_custom_call.1} parent=19 // pred_region
          %p235 = scmp.lt.s32.totalorder %s26, 1
          %s236 = scalar_select %p235, %s26, 1
          %s237 = smul.addr %s236, 8
          %s238 = scalar_lea.vmem %s0, %s237
        $region24: #{tpu_custom_call.1} parent=19 // pred_fallthru
          _
        // Predicated region
        $region25: #{tpu_custom_call.1} parent=19 // pred_check
          %p239 = pneg %p77
        $region26: #{tpu_custom_call.1} parent=19 // pred_check_branch
          %241 = sbr.rel (%p239) target = $region28
        $region27: #{tpu_custom_call.1} parent=19 // pred_region
          %s242 = sand.u32 %s67, 1
          %s243 = sand.u32 %s67, 1
          %s244 = smul.addr %s243, 48
          %s245 = scalar_lea.vmem [#allocation3], %s244
          %s246 = smul.addr %s27, 4
          %s247 = smul.addr %s246, 4
          %s248 = scalar_lea.vmem %s1, %s247
          // Predicated region
          $region29: #{tpu_custom_call.1} parent=27 // pred_check
            _
          $region30: #{tpu_custom_call.1} parent=27 // pred_check_branch
            %250 = sbr.rel (0) target = $region32
          $region31: #{tpu_custom_call.1} parent=27 // pred_region
            // Predicated region
            $region33: #{tpu_custom_call.1} parent=31 // pred_check
              _
            $region34: #{tpu_custom_call.1} parent=31 // pred_check_branch
              %252 = sbr.rel target = $region36
            $region35: #{tpu_custom_call.1} parent=31 // pred_region
              // Predicated region
              $region48: #{tpu_custom_call.1} parent=35 // pred_check
                _
              $region49: #{tpu_custom_call.1} parent=35 // pred_check_branch
                %289 = sbr.rel (0) target = $region51
              $region50: #{tpu_custom_call.1} parent=35 // pred_region
                loop: start=0, step=1, limit=1
                $region52: #{tpu_custom_call.1} parent=50 // loop_pre_header
                  _
                $region53: #{tpu_custom_call.1} parent=50 // loop_header
                  %s291 = sphi 0, %s295
                  %p292 = scmp.ge.s32.totalorder %s291, 1
                  %s296 = sphi %s248, %s248
                  %s297 = sphi %s245, %s245
                $region54: #{tpu_custom_call.1} parent=50 // loop_header_branch
                  %294 = sbr.rel (%p292) target = $region58
                $region55: #{tpu_custom_call.1} parent=50 // loop_body
                  _
                $region56: #{tpu_custom_call.1} parent=50 // loop_footer
                  %s295 = sadd.s32 1, %s291
                $region57: #{tpu_custom_call.1} parent=50 // loop_footer_branch
                  %290 = sbr.rel target = $region53
                $region58: #{tpu_custom_call.1} parent=50 // loop_exit
                  _
                loop: start=0, step=1, limit=1
                $region59: #{tpu_custom_call.1} parent=50 // loop_pre_header
                  _
                $region60: #{tpu_custom_call.1} parent=50 // loop_header
                  %s300 = sphi 0, %s304
                  %p301 = scmp.ge.s32.totalorder %s300, 1
                  %s305 = sphi %s248, %s248
                  %s306 = sphi %s245, %s245
                $region61: #{tpu_custom_call.1} parent=50 // loop_header_branch
                  %303 = sbr.rel (%p301) target = $region65
                $region62: #{tpu_custom_call.1} parent=50 // loop_body
                  %v307 = vld [vmem:[%s305] sm:$0xf]
                  %308 = vst [vmem:[%s306] sm:$0xf] %v307
                  %v309 = vld [vmem:[%s305 + $0x4] sm:$0xf]
                  %310 = vst [vmem:[%s306 + $0x4] sm:$0xf] %v309
                  %v311 = vld [vmem:[%s305 + $0x8] sm:$0xf]
                  %312 = vst [vmem:[%s306 + $0x8] sm:$0xf] %v311
                  %v313 = vld [vmem:[%s305 + $0xc] sm:$0xf]
                  %314 = vst [vmem:[%s306 + $0xc] sm:$0xf] %v313
                  %v315 = vld [vmem:[%s305 + $0x40] sm:$0xf]
                  %316 = vst [vmem:[%s306 + $0x10] sm:$0xf] %v315
                  %v317 = vld [vmem:[%s305 + $0x44] sm:$0xf]
                  %318 = vst [vmem:[%s306 + $0x14] sm:$0xf] %v317
                  %v319 = vld [vmem:[%s305 + $0x48] sm:$0xf]
                  %320 = vst [vmem:[%s306 + $0x18] sm:$0xf] %v319
                  %v321 = vld [vmem:[%s305 + $0x4c] sm:$0xf]
                  %322 = vst [vmem:[%s306 + $0x1c] sm:$0xf] %v321
                  %v323 = vld [vmem:[%s305 + $0x80] sm:$0xf]
                  %324 = vst [vmem:[%s306 + $0x20] sm:$0xf] %v323
                  %v325 = vld [vmem:[%s305 + $0x84] sm:$0xf]
                  %326 = vst [vmem:[%s306 + $0x24] sm:$0xf] %v325
                  %v327 = vld [vmem:[%s305 + $0x88] sm:$0xf]
                  %328 = vst [vmem:[%s306 + $0x28] sm:$0xf] %v327
                  %v329 = vld [vmem:[%s305 + $0x8c] sm:$0xf]
                  %330 = vst [vmem:[%s306 + $0x2c] sm:$0xf] %v329
                $region63: #{tpu_custom_call.1} parent=50 // loop_footer
                  %s304 = sadd.s32 1, %s300
                $region64: #{tpu_custom_call.1} parent=50 // loop_footer_branch
                  %299 = sbr.rel target = $region60
                $region65: #{tpu_custom_call.1} parent=50 // loop_exit
                  _
              $region51: #{tpu_custom_call.1} parent=35 // pred_fallthru
                _
            $region36: #{tpu_custom_call.1} parent=31 // pred_fallthru
              _
            // Predicated region
            $region37: #{tpu_custom_call.1} parent=31 // pred_check
              _
            $region38: #{tpu_custom_call.1} parent=31 // pred_check_branch
              %254 = sbr.rel (0) target = $region40
            $region39: #{tpu_custom_call.1} parent=31 // pred_region
              loop: start=0, step=1, limit=1
              $region41: #{tpu_custom_call.1} parent=39 // loop_pre_header
                _
              $region42: #{tpu_custom_call.1} parent=39 // loop_header
                %s257 = sphi 0, %s261
                %p258 = scmp.ge.s32.totalorder %s257, 1
                %s262 = sphi %s248, %s248
                %s263 = sphi %s245, %s245
              $region43: #{tpu_custom_call.1} parent=39 // loop_header_branch
                %260 = sbr.rel (%p258) target = $region47
              $region44: #{tpu_custom_call.1} parent=39 // loop_body
                %v264 = vld [vmem:[%s262] sm:$0xf]
                %265 = vst [vmem:[%s263] sm:$0xf] %v264
                %v266 = vld [vmem:[%s262 + $0x4] sm:$0xf]
                %267 = vst [vmem:[%s263 + $0x4] sm:$0xf] %v266
                %v268 = vld [vmem:[%s262 + $0x8] sm:$0xf]
                %269 = vst [vmem:[%s263 + $0x8] sm:$0xf] %v268
                %v270 = vld [vmem:[%s262 + $0xc] sm:$0xf]
                %271 = vst [vmem:[%s263 + $0xc] sm:$0xf] %v270
                %v272 = vld [vmem:[%s262 + $0x40] sm:$0xf]
                %273 = vst [vmem:[%s263 + $0x10] sm:$0xf] %v272
                %v274 = vld [vmem:[%s262 + $0x44] sm:$0xf]
                %275 = vst [vmem:[%s263 + $0x14] sm:$0xf] %v274
                %v276 = vld [vmem:[%s262 + $0x48] sm:$0xf]
                %277 = vst [vmem:[%s263 + $0x18] sm:$0xf] %v276
                %v278 = vld [vmem:[%s262 + $0x4c] sm:$0xf]
                %279 = vst [vmem:[%s263 + $0x1c] sm:$0xf] %v278
                %v280 = vld [vmem:[%s262 + $0x80] sm:$0xf]
                %281 = vst [vmem:[%s263 + $0x20] sm:$0xf] %v280
                %v282 = vld [vmem:[%s262 + $0x84] sm:$0xf]
                %283 = vst [vmem:[%s263 + $0x24] sm:$0xf] %v282
                %v284 = vld [vmem:[%s262 + $0x88] sm:$0xf]
                %285 = vst [vmem:[%s263 + $0x28] sm:$0xf] %v284
                %v286 = vld [vmem:[%s262 + $0x8c] sm:$0xf]
                %287 = vst [vmem:[%s263 + $0x2c] sm:$0xf] %v286
              $region45: #{tpu_custom_call.1} parent=39 // loop_footer
                %s261 = sadd.s32 1, %s257
              $region46: #{tpu_custom_call.1} parent=39 // loop_footer_branch
                %256 = sbr.rel target = $region42
              $region47: #{tpu_custom_call.1} parent=39 // loop_exit
                _
            $region40: #{tpu_custom_call.1} parent=31 // pred_fallthru
              _
          $region32: #{tpu_custom_call.1} parent=27 // pred_fallthru
            _
          %331 = vnop
        $region28: #{tpu_custom_call.1} parent=19 // pred_fallthru
          _
        // Predicated region
        $region66: #{tpu_custom_call.1} parent=19 // pred_check
          %p332 = pneg %p103
        $region67: #{tpu_custom_call.1} parent=19 // pred_check_branch
          %334 = sbr.rel (%p332) target = $region69
        $region68: #{tpu_custom_call.1} parent=19 // pred_region
          %s335 = sand.u32 %s93, 1
          %s336 = sand.u32 %s93, 1
          %s337 = smul.addr %s336, 3
          %s338 = scalar_lea.vmem [#allocation4], %s337
          %s339 = scalar_lea.vmem %s2, %s27
          // Predicated region
          $region70: #{tpu_custom_call.1} parent=68 // pred_check
            _
          $region71: #{tpu_custom_call.1} parent=68 // pred_check_branch
            %341 = sbr.rel (0) target = $region73
          $region72: #{tpu_custom_call.1} parent=68 // pred_region
            // Predicated region
            $region74: #{tpu_custom_call.1} parent=72 // pred_check
              _
            $region75: #{tpu_custom_call.1} parent=72 // pred_check_branch
              %343 = sbr.rel target = $region77
            $region76: #{tpu_custom_call.1} parent=72 // pred_region
              // Predicated region
              $region89: #{tpu_custom_call.1} parent=76 // pred_check
                _
              $region90: #{tpu_custom_call.1} parent=76 // pred_check_branch
                %362 = sbr.rel (0) target = $region92
              $region91: #{tpu_custom_call.1} parent=76 // pred_region
                loop: start=0, step=1, limit=1
                $region93: #{tpu_custom_call.1} parent=91 // loop_pre_header
                  _
                $region94: #{tpu_custom_call.1} parent=91 // loop_header
                  %s365 = sphi 0, %s369
                  %p366 = scmp.ge.s32.totalorder %s365, 1
                  %s370 = sphi %s339, %s339
                  %s371 = sphi %s338, %s338
                $region95: #{tpu_custom_call.1} parent=91 // loop_header_branch
                  %368 = sbr.rel (%p366) target = $region99
                $region96: #{tpu_custom_call.1} parent=91 // loop_body
                  %v372 = vld [vmem:[%s370] sm:$0x1]
                  %373 = vst [vmem:[%s371] sm:$0x1] %v372
                  %v374 = vld [vmem:[%s370 + $0x4] sm:$0x1]
                  %375 = vst [vmem:[%s371 + $0x1] sm:$0x1] %v374
                  %v376 = vld [vmem:[%s370 + $0x8] sm:$0x1]
                  %377 = vst [vmem:[%s371 + $0x2] sm:$0x1] %v376
                $region97: #{tpu_custom_call.1} parent=91 // loop_footer
                  %s369 = sadd.s32 1, %s365
                $region98: #{tpu_custom_call.1} parent=91 // loop_footer_branch
                  %364 = sbr.rel target = $region94
                $region99: #{tpu_custom_call.1} parent=91 // loop_exit
                  _
              $region92: #{tpu_custom_call.1} parent=76 // pred_fallthru
                _
            $region77: #{tpu_custom_call.1} parent=72 // pred_fallthru
              _
            // Predicated region
            $region78: #{tpu_custom_call.1} parent=72 // pred_check
              _
            $region79: #{tpu_custom_call.1} parent=72 // pred_check_branch
              %345 = sbr.rel (0) target = $region81
            $region80: #{tpu_custom_call.1} parent=72 // pred_region
              loop: start=0, step=1, limit=1
              $region82: #{tpu_custom_call.1} parent=80 // loop_pre_header
                _
              $region83: #{tpu_custom_call.1} parent=80 // loop_header
                %s348 = sphi 0, %s352
                %p349 = scmp.ge.s32.totalorder %s348, 1
                %s353 = sphi %s339, %s339
                %s354 = sphi %s338, %s338
              $region84: #{tpu_custom_call.1} parent=80 // loop_header_branch
                %351 = sbr.rel (%p349) target = $region88
              $region85: #{tpu_custom_call.1} parent=80 // loop_body
                %v355 = vld [vmem:[%s353] sm:$0x1]
                %356 = vst [vmem:[%s354] sm:$0x1] %v355
                %v357 = vld [vmem:[%s353 + $0x4] sm:$0x1]
                %358 = vst [vmem:[%s354 + $0x1] sm:$0x1] %v357
                %v359 = vld [vmem:[%s353 + $0x8] sm:$0x1]
                %360 = vst [vmem:[%s354 + $0x2] sm:$0x1] %v359
              $region86: #{tpu_custom_call.1} parent=80 // loop_footer
                %s352 = sadd.s32 1, %s348
              $region87: #{tpu_custom_call.1} parent=80 // loop_footer_branch
                %347 = sbr.rel target = $region83
              $region88: #{tpu_custom_call.1} parent=80 // loop_exit
                _
            $region81: #{tpu_custom_call.1} parent=72 // pred_fallthru
              _
          $region73: #{tpu_custom_call.1} parent=68 // pred_fallthru
            _
          %378 = vnop
        $region69: #{tpu_custom_call.1} parent=19 // pred_fallthru
          _
        // Predicated region
        $region100: #{tpu_custom_call.1} parent=19 // pred_check
          %p379 = pneg %p129
        $region101: #{tpu_custom_call.1} parent=19 // pred_check_branch
          %381 = sbr.rel (%p379) target = $region103
        $region102: #{tpu_custom_call.1} parent=19 // pred_region
          %p382 = scmp.lt.s32.totalorder %s27, 3
          %s383 = scalar_select %p382, %s27, 3
          %s384 = smul.addr %s383, 4
          %s385 = scalar_lea.vmem %s3, %s384
        $region103: #{tpu_custom_call.1} parent=19 // pred_fallthru
          _
      $region20: #{tpu_custom_call.1} parent=5 // pred_fallthru
        _
      %p386 = scmp.le.s32.totalorder 1, %s19
      %p387 = scmp.lt.s32.totalorder %s19, 9
      %p388 = pnand %p386, %p387
      %p389 = pneg %p388
      // Predicated region
      $region104: #{tpu_custom_call.1} parent=5 // pred_check
        _
      $region105: #{tpu_custom_call.1} parent=5 // pred_check_branch
        %391 = sbr.rel (%p388) target = $region107
      $region106: #{tpu_custom_call.1} parent=5 // pred_region
        %s392 = ssub.s32 %s19, 1
        %s393 = sand.u32 %s70, 1
        %s394 = sand.u32 %s70, 1
        %s395 = smul.addr %s394, 48
        %s396 = scalar_lea.vmem [#allocation3], %s395
        // Predicated region
        $region108: #{tpu_custom_call.1} parent=106 // pred_check
          %p397 = pneg %p83
        $region109: #{tpu_custom_call.1} parent=106 // pred_check_branch
          %399 = sbr.rel (%p397) target = $region111
        $region110: #{tpu_custom_call.1} parent=106 // pred_region
          _
        $region111: #{tpu_custom_call.1} parent=106 // pred_fallthru
          _
        %s400 = sand.u32 %s96, 1
        %s401 = sand.u32 %s96, 1
        %s402 = smul.addr %s401, 3
        %s403 = scalar_lea.vmem [#allocation4], %s402
        // Predicated region
        $region112: #{tpu_custom_call.1} parent=106 // pred_check
          %p404 = pneg %p109
        $region113: #{tpu_custom_call.1} parent=106 // pred_check_branch
          %406 = sbr.rel (%p404) target = $region115
        $region114: #{tpu_custom_call.1} parent=106 // pred_region
          _
        $region115: #{tpu_custom_call.1} parent=106 // pred_fallthru
          _
        %p407 = scmp.lt.s32.totalorder %s28, 1
        %s408 = scalar_select %p407, %s28, 1
        %s409 = smul.addr %s408, 8
        %s410 = scalar_lea.vmem %s0, %s409
        %p411 = pneg %p57
        %p412 = pneg %p54
        %s413 = sand.u32 %s70, 1
        %s414 = sand.u32 %s70, 1
        %s415 = smul.addr %s414, 48
        %s416 = scalar_lea.vmem [#allocation3], %s415
        %p417 = pneg %p83
        %p418 = pneg %p80
        %s419 = sand.u32 %s96, 1
        %s420 = sand.u32 %s96, 1
        %s421 = smul.addr %s420, 3
        %s422 = scalar_lea.vmem [#allocation4], %s421
        %p423 = pneg %p109
        %p424 = pneg %p106
        %p425 = scmp.lt.s32.totalorder %s29, 3
        %s426 = scalar_select %p425, %s29, 3
        %s427 = smul.addr %s426, 4
        %s428 = scalar_lea.vmem %s3, %s427
        %p429 = pneg %p135
        %p430 = pneg %p132
        %p431 = pneg %p156
        %p432 = pneg %p153
        %p433 = pneg %p182
        %p434 = pneg %p179
        %s435 = sand.u32 %s169, 1
        %s436 = scalar_lea.sflag [#allocation6], %s435
        %s437 = sand.u32 %s169, 1
        %s438 = smul.addr %s437, 8
        %s439 = scalar_lea.vmem [#allocation5], %s438
        %p440 = pneg %p210
        %p441 = pneg %p207
        %s442 = sand.u32 %s197, 1
        %s443 = scalar_lea.sflag [#allocation8], %s442
        %s444 = sand.u32 %s197, 1
        %s445 = smul.addr %s444, 8
        %s446 = scalar_lea.vmem [#allocation7], %s445
        %p447 = scmp.lt.s32.totalorder %s28, 1
        %s448 = scalar_select %p447, %s28, 1
        %s449 = smul.addr %s448, 8
        %s450 = scalar_lea.vmem %s0, %s449
        %p451 = scmp.lt.s32.totalorder %s29, 3
        %s452 = scalar_select %p451, %s29, 3
        %s453 = smul.addr %s452, 4
        %s454 = scalar_lea.vmem %s3, %s453
        %p456 = scmp.eq.s32.totalorder %s29, 0
        // Predicated region
        $region116: #{tpu_custom_call.1} parent=106 // pred_check
          %p457 = pneg %p456
        $region117: #{tpu_custom_call.1} parent=106 // pred_check_branch
          %459 = sbr.rel (%p457) target = $region119
        $region118: #{tpu_custom_call.1} parent=106 // pred_region
          %vm460 = vcmask 261120
          %461 = vst.msk [vmem:[#allocation2] sm:$0xff] %vm460, 0.0
        $region119: #{tpu_custom_call.1} parent=106 // pred_fallthru
          _
        %v462 = vld [vmem:[%s450] sm:$0xff]
        %v463 = vpack.c.bf16 %v462, %v462
        %v464 = vld [vmem:[%s396] sm:$0xf]
        %v465 = vld [vmem:[%s396 + $0x4] sm:$0xf]
        %v466 = vld [vmem:[%s396 + $0x8] sm:$0xf]
        %v467 = vld [vmem:[%s396 + $0xc] sm:$0xf]
        %v468 = vld [vmem:[%s403] sm:$0x1]
        %v470 = vlaneseq
        %v471 = vshrl.u32 %v470, 7
        %v472 = vsub.s32 0, %v471
        %v473 = vrot.slane %v468, %v472
        %v479 = vunpack.c.l.b16 %v464
        %v480 = vunpack.c.l.b16 %v465
        %v481 = vunpack.c.l.b16 %v466
        %v482 = vunpack.c.l.b16 %v467
        %v483 = vpack.c.b16 %v480, %v479
        %v484 = vpack.c.b16 %v482, %v481
        %vm487 = vcmask 261120
        %v489 = vsel %vm487, %v463, 0
        %491 = vmatprep.subr.bf16.mxu0 0
        %492 = vmatpush1.bf16.msra.mxu0 %v483
        %493 = vmatprep.subr.bf16.mxu0 0
        %494 = vmatpush1.bf16.msra.mxu0 %v484
        %495 = vmatprep.subr.bf16.mxu0 0
        %496 = vmatpush1.bf16.msra.mxu0 0
        %497 = vmatprep.subr.bf16.mxu0 0
        %498 = vmatpush1.bf16.msra.mxu0 0
        %499 = vmatprep.subr.bf16.mxu0 0
        %500 = vmatpush1.bf16.msra.mxu0 0
        %501 = vmatprep.subr.bf16.mxu0 0
        %502 = vmatpush1.bf16.msra.mxu0 0
        %503 = vmatprep.subr.bf16.mxu0 0
        %504 = vmatpush1.bf16.msra.mxu0 0
        %505 = vmatprep.subr.bf16.mxu0 0
        %506 = vmatpush1.bf16.msra.mxu0 0
        %507 = vmatprep.subr.bf16.mxu0 0
        %508 = vmatpush1.bf16.msra.mxu0 0
        %509 = vmatprep.subr.bf16.mxu0 0
        %510 = vmatpush1.bf16.msra.mxu0 0
        %511 = vmatprep.subr.bf16.mxu0 0
        %512 = vmatpush1.bf16.msra.mxu0 0
        %513 = vmatprep.subr.bf16.mxu0 0
        %514 = vmatpush1.bf16.msra.mxu0 0
        %515 = vmatprep.subr.bf16.mxu0 0
        %516 = vmatpush1.bf16.msra.mxu0 0
        %517 = vmatprep.subr.bf16.mxu0 0
        %518 = vmatpush1.bf16.msra.mxu0 0
        %519 = vmatprep.subr.bf16.mxu0 0
        %520 = vmatpush1.bf16.msra.mxu0 0
        %521 = vmatprep.subr.bf16.mxu0 0
        %522 = vmatpush1.bf16.msra.mxu0 0
        %523 = vmatprep.mubr.bf16.mxu0 0
        %524 = vmatmul.mubr.bf16.gmra.mrb[0].mxu0 %v489
        %v525 = vpop.f32.mrb[0].mxu0
        %v526 = vadd.f32 %v473, %v525
        %v527 = vpop.f32.mrb[0].mxu0
        %v528 = vpop.f32.mrb[0].mxu0
        %v529 = vpop.f32.mrb[0].mxu0
        %530 = vdwg.mxu0
        %s531 = scalar_lea.vmem %s396, 16 [#allocation3]
        %v532 = vld [vmem:[%s531] sm:$0xf]
        %v533 = vld [vmem:[%s531 + $0x4] sm:$0xf]
        %v534 = vld [vmem:[%s531 + $0x8] sm:$0xf]
        %v535 = vld [vmem:[%s531 + $0xc] sm:$0xf]
        %s536 = scalar_lea.vmem %s403, 1 [#allocation4]
        %v537 = vld [vmem:[%s536] sm:$0x1]
        %v539 = vlaneseq
        %v540 = vshrl.u32 %v539, 7
        %v541 = vsub.s32 0, %v540
        %v542 = vrot.slane %v537, %v541
        %v548 = vunpack.c.l.b16 %v532
        %v549 = vunpack.c.l.b16 %v533
        %v550 = vunpack.c.l.b16 %v534
        %v551 = vunpack.c.l.b16 %v535
        %v552 = vpack.c.b16 %v549, %v548
        %v553 = vpack.c.b16 %v551, %v550
        %556 = vmatprep.subr.bf16.mxu0 0
        %557 = vmatpush1.bf16.msra.mxu0 %v552
        %558 = vmatprep.subr.bf16.mxu0 0
        %559 = vmatpush1.bf16.msra.mxu0 %v553
        %560 = vmatprep.subr.bf16.mxu0 0
        %561 = vmatpush1.bf16.msra.mxu0 0
        %562 = vmatprep.subr.bf16.mxu0 0
        %563 = vmatpush1.bf16.msra.mxu0 0
        %564 = vmatprep.subr.bf16.mxu0 0
        %565 = vmatpush1.bf16.msra.mxu0 0
        %566 = vmatprep.subr.bf16.mxu0 0
        %567 = vmatpush1.bf16.msra.mxu0 0
        %568 = vmatprep.subr.bf16.mxu0 0
        %569 = vmatpush1.bf16.msra.mxu0 0
        %570 = vmatprep.subr.bf16.mxu0 0
        %571 = vmatpush1.bf16.msra.mxu0 0
        %572 = vmatprep.subr.bf16.mxu0 0
        %573 = vmatpush1.bf16.msra.mxu0 0
        %574 = vmatprep.subr.bf16.mxu0 0
        %575 = vmatpush1.bf16.msra.mxu0 0
        %576 = vmatprep.subr.bf16.mxu0 0
        %577 = vmatpush1.bf16.msra.mxu0 0
        %578 = vmatprep.subr.bf16.mxu0 0
        %579 = vmatpush1.bf16.msra.mxu0 0
        %580 = vmatprep.subr.bf16.mxu0 0
        %581 = vmatpush1.bf16.msra.mxu0 0
        %582 = vmatprep.subr.bf16.mxu0 0
        %583 = vmatpush1.bf16.msra.mxu0 0
        %584 = vmatprep.subr.bf16.mxu0 0
        %585 = vmatpush1.bf16.msra.mxu0 0
        %586 = vmatprep.subr.bf16.mxu0 0
        %587 = vmatpush1.bf16.msra.mxu0 0
        %588 = vmatprep.mubr.bf16.mxu0 0
        %589 = vmatmul.mubr.bf16.gmra.mrb[0].mxu0 %v489
        %v590 = vpop.f32.mrb[0].mxu0
        %v591 = vadd.f32 %v542, %v590
        %v592 = vpop.f32.mrb[0].mxu0
        %v593 = vpop.f32.mrb[0].mxu0
        %v594 = vpop.f32.mrb[0].mxu0
        %595 = vdwg.mxu0
        %s596 = scalar_lea.vmem %s396, 32 [#allocation3]
        %v597 = vld [vmem:[%s596] sm:$0xf]
        %v598 = vld [vmem:[%s596 + $0x4] sm:$0xf]
        %v599 = vld [vmem:[%s596 + $0x8] sm:$0xf]
        %v600 = vld [vmem:[%s596 + $0xc] sm:$0xf]
        %s601 = scalar_lea.vmem %s403, 2 [#allocation4]
        %v602 = vld [vmem:[%s601] sm:$0x1]
        %v604 = vlaneseq
        %v605 = vshrl.u32 %v604, 7
        %v606 = vsub.s32 0, %v605
        %v607 = vrot.slane %v602, %v606
        %v613 = vunpack.c.l.b16 %v597
        %v614 = vunpack.c.l.b16 %v598
        %v615 = vunpack.c.l.b16 %v599
        %v616 = vunpack.c.l.b16 %v600
        %v617 = vpack.c.b16 %v614, %v613
        %v618 = vpack.c.b16 %v616, %v615
        %621 = vmatprep.subr.bf16.mxu0 0
        %622 = vmatpush1.bf16.msra.mxu0 %v617
        %623 = vmatprep.subr.bf16.mxu0 0
        %624 = vmatpush1.bf16.msra.mxu0 %v618
        %625 = vmatprep.subr.bf16.mxu0 0
        %626 = vmatpush1.bf16.msra.mxu0 0
        %627 = vmatprep.subr.bf16.mxu0 0
        %628 = vmatpush1.bf16.msra.mxu0 0
        %629 = vmatprep.subr.bf16.mxu0 0
        %630 = vmatpush1.bf16.msra.mxu0 0
        %631 = vmatprep.subr.bf16.mxu0 0
        %632 = vmatpush1.bf16.msra.mxu0 0
        %633 = vmatprep.subr.bf16.mxu0 0
        %634 = vmatpush1.bf16.msra.mxu0 0
        %635 = vmatprep.subr.bf16.mxu0 0
        %636 = vmatpush1.bf16.msra.mxu0 0
        %637 = vmatprep.subr.bf16.mxu0 0
        %638 = vmatpush1.bf16.msra.mxu0 0
        %639 = vmatprep.subr.bf16.mxu0 0
        %640 = vmatpush1.bf16.msra.mxu0 0
        %641 = vmatprep.subr.bf16.mxu0 0
        %642 = vmatpush1.bf16.msra.mxu0 0
        %643 = vmatprep.subr.bf16.mxu0 0
        %644 = vmatpush1.bf16.msra.mxu0 0
        %645 = vmatprep.subr.bf16.mxu0 0
        %646 = vmatpush1.bf16.msra.mxu0 0
        %647 = vmatprep.subr.bf16.mxu0 0
        %648 = vmatpush1.bf16.msra.mxu0 0
        %649 = vmatprep.subr.bf16.mxu0 0
        %650 = vmatpush1.bf16.msra.mxu0 0
        %651 = vmatprep.subr.bf16.mxu0 0
        %652 = vmatpush1.bf16.msra.mxu0 0
        %653 = vmatprep.mubr.bf16.mxu0 0
        %654 = vmatmul.mubr.bf16.gmra.mrb[0].mxu0 %v489
        %v655 = vpop.f32.mrb[0].mxu0
        %v656 = vadd.f32 %v607, %v655
        %v657 = vpop.f32.mrb[0].mxu0
        %v658 = vpop.f32.mrb[0].mxu0
        %v659 = vpop.f32.mrb[0].mxu0
        %660 = vdwg.mxu0
        %v661 = vpack.c.bf16 %v526, %v526
        %v662 = vpack.c.bf16 %v591, %v591
        %vm663 = vcmask 64512
        %v665 = vsel %vm663, %v661, 0
        %v668 = vsel %vm663, %v662, 0
        %670 = vmatprep.subr.bf16.mxu0 0
        %671 = vmatpush1.bf16.xpose.msra.mxu0 %v668
        %672 = vmatprep.subr.bf16.mxu0 0
        %673 = vmatpush1.bf16.xpose.msra.mxu0 0
        %674 = vmatprep.subr.bf16.mxu0 0
        %675 = vmatpush1.bf16.xpose.msra.mxu0 0
        %676 = vmatprep.subr.bf16.mxu0 0
        %677 = vmatpush1.bf16.xpose.msra.mxu0 0
        %678 = vmatprep.subr.bf16.mxu0 0
        %679 = vmatpush1.bf16.xpose.msra.mxu0 0
        %680 = vmatprep.subr.bf16.mxu0 0
        %681 = vmatpush1.bf16.xpose.msra.mxu0 0
        %682 = vmatprep.subr.bf16.mxu0 0
        %683 = vmatpush1.bf16.xpose.msra.mxu0 0
        %684 = vmatprep.subr.bf16.mxu0 0
        %685 = vmatpush1.bf16.xpose.msra.mxu0 0
        %686 = vmatprep.subr.bf16.mxu0 0
        %687 = vmatpush1.bf16.xpose.msra.mxu0 0
        %688 = vmatprep.subr.bf16.mxu0 0
        %689 = vmatpush1.bf16.xpose.msra.mxu0 0
        %690 = vmatprep.subr.bf16.mxu0 0
        %691 = vmatpush1.bf16.xpose.msra.mxu0 0
        %692 = vmatprep.subr.bf16.mxu0 0
        %693 = vmatpush1.bf16.xpose.msra.mxu0 0
        %694 = vmatprep.subr.bf16.mxu0 0
        %695 = vmatpush1.bf16.xpose.msra.mxu0 0
        %696 = vmatprep.subr.bf16.mxu0 0
        %697 = vmatpush1.bf16.xpose.msra.mxu0 0
        %698 = vmatprep.subr.bf16.mxu0 0
        %699 = vmatpush1.bf16.xpose.msra.mxu0 0
        %700 = vmatprep.subr.bf16.mxu0 0
        %701 = vmatpush1.bf16.xpose.msra.mxu0 0
        %702 = vmatprep.mubr.bf16.mxu0 0
        %703 = vmatmul.mubr.bf16.gmra.mrb[0].mxu0 %v665
        %v704 = vpop.f32.mrb[0].mxu0
        %v705 = vadd.f32 0.0, %v704
        %v706 = vpop.f32.mrb[0].mxu0
        %v707 = vpop.f32.mrb[0].mxu0
        %v708 = vpop.f32.mrb[0].mxu0
        %709 = vdwg.mxu0
        %v710 = vsel %vm663, %v705, -inf
        %711 = vmax.xlane.f32.xlu0 %v710
        %v712 = vpop.xlane.xlu0 %711
        %v713 = vsub.f32 %v705, %v712
        %v714 = vmul.f32 %v713, 1.442695
        %v715 = vpow.pop %v714
        %v716 = vsel %vm663, %v715, 0.0
        %717 = vadd.xlane.f32.xlu0 %v716
        %v718 = vpop.xlane.xlu0 %717
        %v719 = vrcp.pop %v718
        %v720 = vmul.f32 %v715, %v719
        %721 = vst.msk [vmem:[%s446] sm:$0xff] %vm663, %v720
        %v722 = vpack.c.bf16 %v720, %v720
        %v723 = vpack.c.bf16 %v656, %v656
        %v725 = vsel %vm663, %v722, 0
        %vm727 = vcmask 1043456
        %v729 = vsel %vm727, %v723, 0
        %731 = vmatprep.subr.bf16.mxu0 0
        %732 = vmatpush1.bf16.msra.mxu0 %v729
        %733 = vmatprep.subr.bf16.mxu0 0
        %734 = vmatpush1.bf16.msra.mxu0 0
        %735 = vmatprep.subr.bf16.mxu0 0
        %736 = vmatpush1.bf16.msra.mxu0 0
        %737 = vmatprep.subr.bf16.mxu0 0
        %738 = vmatpush1.bf16.msra.mxu0 0
        %739 = vmatprep.subr.bf16.mxu0 0
        %740 = vmatpush1.bf16.msra.mxu0 0
        %741 = vmatprep.subr.bf16.mxu0 0
        %742 = vmatpush1.bf16.msra.mxu0 0
        %743 = vmatprep.subr.bf16.mxu0 0
        %744 = vmatpush1.bf16.msra.mxu0 0
        %745 = vmatprep.subr.bf16.mxu0 0
        %746 = vmatpush1.bf16.msra.mxu0 0
        %747 = vmatprep.subr.bf16.mxu0 0
        %748 = vmatpush1.bf16.msra.mxu0 0
        %749 = vmatprep.subr.bf16.mxu0 0
        %750 = vmatpush1.bf16.msra.mxu0 0
        %751 = vmatprep.subr.bf16.mxu0 0
        %752 = vmatpush1.bf16.msra.mxu0 0
        %753 = vmatprep.subr.bf16.mxu0 0
        %754 = vmatpush1.bf16.msra.mxu0 0
        %755 = vmatprep.subr.bf16.mxu0 0
        %756 = vmatpush1.bf16.msra.mxu0 0
        %757 = vmatprep.subr.bf16.mxu0 0
        %758 = vmatpush1.bf16.msra.mxu0 0
        %759 = vmatprep.subr.bf16.mxu0 0
        %760 = vmatpush1.bf16.msra.mxu0 0
        %761 = vmatprep.subr.bf16.mxu0 0
        %762 = vmatpush1.bf16.msra.mxu0 0
        %763 = vmatprep.mubr.bf16.mxu0 0
        %764 = vmatmul.mubr.bf16.gmra.mrb[0].mxu0 %v725
        %v765 = vpop.f32.mrb[0].mxu0
        %v766 = vadd.f32 0.0, %v765
        %v767 = vpop.f32.mrb[0].mxu0
        %v768 = vpop.f32.mrb[0].mxu0
        %v769 = vpop.f32.mrb[0].mxu0
        %770 = vdwg.mxu0
        %v771 = vld [vmem:[#allocation2] sm:$0xff]
        %v772 = vpack.c.bf16 %v766, %v766
        %v773 = vld [vmem:[%s454] sm:$0xf]
        %v775 = vsel %vm663, %v772, 0
        %v778 = vsel %vm727, %v773, 0
        %780 = vmatprep.subr.bf16.mxu0 0
        %781 = vmatpush1.bf16.msra.mxu0 %v778
        %782 = vmatprep.subr.bf16.mxu0 0
        %783 = vmatpush1.bf16.msra.mxu0 0
        %784 = vmatprep.subr.bf16.mxu0 0
        %785 = vmatpush1.bf16.msra.mxu0 0
        %786 = vmatprep.subr.bf16.mxu0 0
        %787 = vmatpush1.bf16.msra.mxu0 0
        %788 = vmatprep.subr.bf16.mxu0 0
        %789 = vmatpush1.bf16.msra.mxu0 0
        %790 = vmatprep.subr.bf16.mxu0 0
        %791 = vmatpush1.bf16.msra.mxu0 0
        %792 = vmatprep.subr.bf16.mxu0 0
        %793 = vmatpush1.bf16.msra.mxu0 0
        %794 = vmatprep.subr.bf16.mxu0 0
        %795 = vmatpush1.bf16.msra.mxu0 0
        %796 = vmatprep.subr.bf16.mxu0 0
        %797 = vmatpush1.bf16.msra.mxu0 0
        %798 = vmatprep.subr.bf16.mxu0 0
        %799 = vmatpush1.bf16.msra.mxu0 0
        %800 = vmatprep.subr.bf16.mxu0 0
        %801 = vmatpush1.bf16.msra.mxu0 0
        %802 = vmatprep.subr.bf16.mxu0 0
        %803 = vmatpush1.bf16.msra.mxu0 0
        %804 = vmatprep.subr.bf16.mxu0 0
        %805 = vmatpush1.bf16.msra.mxu0 0
        %806 = vmatprep.subr.bf16.mxu0 0
        %807 = vmatpush1.bf16.msra.mxu0 0
        %808 = vmatprep.subr.bf16.mxu0 0
        %809 = vmatpush1.bf16.msra.mxu0 0
        %810 = vmatprep.subr.bf16.mxu0 0
        %811 = vmatpush1.bf16.msra.mxu0 0
        %812 = vmatprep.mubr.bf16.mxu0 0
        %813 = vmatmul.mubr.bf16.gmra.mrb[0].mxu0 %v775
        %v814 = vpop.f32.mrb[0].mxu0
        %v815 = vadd.f32 0.0, %v814
        %v816 = vpop.f32.mrb[0].mxu0
        %v817 = vpop.f32.mrb[0].mxu0
        %v818 = vpop.f32.mrb[0].mxu0
        %819 = vdwg.mxu0
        %v820 = vadd.f32 %v771, %v815
        %821 = vst.msk [vmem:[#allocation2] sm:$0xff] %vm487, %v820
        %p822 = scmp.eq.s32.totalorder %s29, 3
        // Predicated region
        $region120: #{tpu_custom_call.1} parent=106 // pred_check
          %p823 = pneg %p822
        $region121: #{tpu_custom_call.1} parent=106 // pred_check_branch
          %825 = sbr.rel (%p823) target = $region123
        $region122: #{tpu_custom_call.1} parent=106 // pred_region
          %v826 = vld [vmem:[#allocation2] sm:$0xff]
          %v827 = vld [vmem:[%s4] sm:$0x1]
          %v829 = vlaneseq
          %v830 = vshrl.u32 %v829, 7
          %v831 = vsub.s32 0, %v830
          %v832 = vrot.slane %v827, %v831
          %v834 = vadd.f32 %v826, %v832
          %v835 = vmax.f32 %v834, 0.0
          %836 = vst.msk [vmem:[%s439] sm:$0xff] %vm487, %v835
        $region123: #{tpu_custom_call.1} parent=106 // pred_fallthru
          _
        %s837 = sand.u32 %s169, 1
        %s838 = scalar_lea.sflag [#allocation6], %s837
        %s839 = sand.u32 %s169, 1
        %s840 = smul.addr %s839, 8
        %s841 = scalar_lea.vmem [#allocation5], %s840
        %s842 = sand.u32 %s197, 1
        %s843 = scalar_lea.sflag [#allocation8], %s842
        %s844 = sand.u32 %s197, 1
        %s845 = smul.addr %s844, 8
        %s846 = scalar_lea.vmem [#allocation7], %s845
        // Predicated region
        $region124: #{tpu_custom_call.1} parent=106 // pred_check
          %p847 = pneg %p179
        $region125: #{tpu_custom_call.1} parent=106 // pred_check_branch
          %849 = sbr.rel (%p847) target = $region127
        $region126: #{tpu_custom_call.1} parent=106 // pred_region
          %s851 = ssub.s32 128, 128
          %852 = vsyncadd %s838, %s851
          %s853 = smul.addr %s28, 128
          %s854 = scalar_lea.hbm %s5, %s853
          %s856 = sshll.u32 %s841, 4
          %s857 = int_to_ptr.vmem [resolvable:$true] %s856
          %859 = dma.vmem_to_hbm [thread:$0]  %s857, 128, %s854, %s838
        $region127: #{tpu_custom_call.1} parent=106 // pred_fallthru
          _
        // Predicated region
        $region128: #{tpu_custom_call.1} parent=106 // pred_check
          %p860 = pneg %p207
        $region129: #{tpu_custom_call.1} parent=106 // pred_check_branch
          %862 = sbr.rel (%p860) target = $region131
        $region130: #{tpu_custom_call.1} parent=106 // pred_region
          %s864 = ssub.s32 128, 128
          %865 = vsyncadd %s843, %s864
          %s866 = smul.addr %s28, 4
          %s867 = sadd.s32 %s29, %s866
          %s868 = smul.addr %s867, 128
          %s869 = scalar_lea.hbm %s6, %s868
          %s871 = sshll.u32 %s846, 4
          %s872 = int_to_ptr.vmem [resolvable:$true] %s871
          %874 = dma.vmem_to_hbm [thread:$0]  %s872, 128, %s869, %s843
        $region131: #{tpu_custom_call.1} parent=106 // pred_fallthru
          _
      $region107: #{tpu_custom_call.1} parent=5 // pred_fallthru
        _
      %p875 = scmp.le.s32.totalorder 2, %s19
      // Predicated region
      $region132: #{tpu_custom_call.1} parent=5 // pred_check
        %p876 = pneg %p875
      $region133: #{tpu_custom_call.1} parent=5 // pred_check_branch
        %878 = sbr.rel (%p876) target = $region135
      $region134: #{tpu_custom_call.1} parent=5 // pred_region
        %s879 = ssub.s32 %s19, 2
        // Predicated region
        $region136: #{tpu_custom_call.1} parent=134 // pred_check
          %p880 = pneg %p185
        $region137: #{tpu_custom_call.1} parent=134 // pred_check_branch
          %882 = sbr.rel (%p880) target = $region139
        $region138: #{tpu_custom_call.1} parent=134 // pred_region
          %s883 = sand.u32 %s170, 1
          %s884 = scalar_lea.sflag [#allocation6], %s883
          %s885 = sand.u32 %s170, 1
          %s886 = smul.addr %s885, 8
          %s887 = scalar_lea.vmem [#allocation5], %s886
          %888 = dma.done %s884, 128
        $region139: #{tpu_custom_call.1} parent=134 // pred_fallthru
          _
        // Predicated region
        $region140: #{tpu_custom_call.1} parent=134 // pred_check
          %p889 = pneg %p213
        $region141: #{tpu_custom_call.1} parent=134 // pred_check_branch
          %891 = sbr.rel (%p889) target = $region143
        $region142: #{tpu_custom_call.1} parent=134 // pred_region
          %s892 = sand.u32 %s198, 1
          %s893 = scalar_lea.sflag [#allocation8], %s892
          %s894 = sand.u32 %s198, 1
          %s895 = smul.addr %s894, 8
          %s896 = scalar_lea.vmem [#allocation7], %s895
          %897 = dma.done %s893, 128
        $region143: #{tpu_custom_call.1} parent=134 // pred_fallthru
          _
      $region135: #{tpu_custom_call.1} parent=5 // pred_fallthru
        _
    $region6: #{tpu_custom_call.1} parent=1 // loop_footer
      %s23 = sadd.s32 1, %s19
    $region7: #{tpu_custom_call.1} parent=1 // loop_footer_branch
      %18 = sbr.rel target = $region3
    $region8: #{tpu_custom_call.1} parent=1 // loop_exit
      _
    %898 = vsyncpa [#allocation6], 1
    %s899 = scalar_lea.sflag [#allocation6], 1
    %900 = vsyncpa %s899, 1
    %901 = vsyncpa [#allocation8], 1
    %s902 = scalar_lea.sflag [#allocation8], 1
    %903 = vsyncpa %s902, 1

</llo_original>
